<compile_context>
chip_gen: v7x
topology: tpu7x:2x2x1
jax: 0.10.0
libtpu: 0.0.40
codegen_flags: <defaults>
</compile_context>

<pallas_src>
import numpy as np
import jax
import jax.numpy as jnp
from jax import lax
from jax.experimental import pallas as pl
from jax.experimental.pallas import tpu as pltpu


# ----------------------------- Pallas kernel ------------------------------ #
def _clip_align_kernel(scale_ref,        # SMEM (1,)      : exp(logit_scale), precomputed
                       feats_ref,        # VMEM (2B, 512) f32 : [img; txt] stacked on sublanes
                       wcat_hbm,         # ANY  (512, 512) bf16 : [img_align | txt_align] on lanes
                       lpi_ref,          # VMEM (B, B)    f32 : logits_per_image
                       ai_ref,           # VMEM (B, 256)  f32 : aligned image feats
                       at_ref,           # VMEM (B, 256)  f32 : aligned text  feats
                       wbuf,             # VMEM (512, 512) bf16 scratch (align weights)
                       wsem):            # DMA semaphore for the weight copy
    B = lpi_ref.shape[0]
    D_out = ai_ref.shape[1]

    # Kick off the align-weight DMA immediately so it overlaps the
    # normalization + logits compute (which never read the weights).
    wcopy = pltpu.make_async_copy(wcat_hbm, wbuf, wsem)
    wcopy.start()

    # Fused L2 normalization over the pre-stacked (2B, 512) tile: one squared-
    # sum reduction + one rsqrt pass. rsqrt goes to the EUP (free slot);
    # the epsilon floor only guards degenerate all-zero rows (PyTorch would
    # produce nan there), real inputs are unaffected.
    feats = feats_ref[...].astype(jnp.float32)
    ss = jnp.sum(feats * feats, axis=1, keepdims=True)
    feats_n = feats * lax.rsqrt(jnp.maximum(ss, jnp.float32(1e-30)))
    img_n = feats_n[:B]
    txt_n = feats_n[B:]

    # logits_per_image in f32: contract the feature dim of both operands
    # directly (no txt_n transpose, no bf16 quantization amplified by the
    # logit scale). logits_per_text = lpi.T is handled by the wrapper.
    logits = lax.dot_general(
        img_n, txt_n,
        dimension_numbers=(((1,), (1,)), ((), ())),
        preferred_element_type=jnp.float32)
    lpi_ref[...] = scale_ref[0] * logits

    # Weights are needed only now; by this point the DMA has been overlapped
    # with everything above.
    wcopy.wait()

    # bf16 MXU operands for the align dots (halved weight DMA), f32 accumulate.
    img_bf = img_n.astype(jnp.bfloat16)
    txt_bf = txt_n.astype(jnp.bfloat16)

    # Static lane-views of the packed weight slab (256 is a lane-tile multiple).
    wimg = wbuf[:, :D_out]
    wtxt = wbuf[:, D_out:]

    ai = jnp.dot(img_bf, wimg, preferred_element_type=jnp.float32)
    ai_ref[...] = ai * lax.rsqrt(
        jnp.maximum(jnp.sum(ai * ai, axis=1, keepdims=True), jnp.float32(1e-30)))

    at = jnp.dot(txt_bf, wtxt, preferred_element_type=jnp.float32)
    at_ref[...] = at * lax.rsqrt(
        jnp.maximum(jnp.sum(at * at, axis=1, keepdims=True), jnp.float32(1e-30)))


def clip_align_pallas(logit_scale, image_features, text_features,
                      img_align, txt_align):
    """logit_scale: (1,) pre-exp; features: (B, 512) f32; *_align: (512, 256) f32.

    Returns (logits_per_image, logits_per_text, aligned_image, aligned_text).
    """
    B, D_feat = image_features.shape
    D_out = img_align.shape[1]

    # Hoist the scalar exp out of the kernel.
    scale_exp = jnp.exp(logit_scale).astype(jnp.float32)

    # Pre-stack features (one input DMA, no in-kernel concatenate copy) and
    # pack both align weights into one bf16 slab (one DMA + one semaphore,
    # half the weight bytes).
    feats_stacked = jnp.concatenate([image_features, text_features],
                                    axis=0).astype(jnp.float32)          # (2B, 512)
    wcat_bf16 = jnp.concatenate([img_align, txt_align],
                                axis=1).astype(jnp.bfloat16)             # (512, 512)

    out_shapes = (
        jax.ShapeDtypeStruct((B, B), jnp.float32),      # logits_per_image
        jax.ShapeDtypeStruct((B, D_out), jnp.float32),  # aligned image feats
        jax.ShapeDtypeStruct((B, D_out), jnp.float32),  # aligned text feats
    )
    lpi, ai, at = pl.pallas_call(
        _clip_align_kernel,
        out_shape=out_shapes,
        in_specs=[
            pl.BlockSpec(memory_space=pltpu.SMEM),   # exp(logit_scale) (1,)
            pl.BlockSpec(memory_space=pltpu.VMEM),   # stacked features (2B, 512)
            pl.BlockSpec(memory_space=pl.ANY),       # packed align weights (HBM)
        ],
        out_specs=(
            pl.BlockSpec(memory_space=pltpu.VMEM),
            pl.BlockSpec(memory_space=pltpu.VMEM),
            pl.BlockSpec(memory_space=pltpu.VMEM),
        ),
        scratch_shapes=[
            pltpu.VMEM((D_feat, 2 * D_out), jnp.bfloat16),   # weight landing buffer
            pltpu.SemaphoreType.DMA,                         # weight-copy semaphore
        ],
    )(scale_exp, feats_stacked, wcat_bf16)

    # Pure transpose handled by the caller (no in-kernel XLU transpose /
    # duplicate BxB store).
    logits_per_text = lpi.T
    return lpi, logits_per_text, ai, at


# ------------------------- stand-in CLIP encoders -------------------------- #
# TODO(synk): the real CLIP visual / text transformer encoders
# (self.model.encode_image / encode_text) have no clean single-kernel Pallas
# equivalent here; they are replaced with deterministic linear stand-ins.
def encode_image_stub(x_v, w_vis):
    # x_v: NCHW (B, 3, 16, 16) -> flatten -> (B, 512)
    B = x_v.shape[0]
    return jnp.reshape(x_v, (B, -1)) @ w_vis


def encode_text_stub(x_u, emb, w_txt):
    # x_u: (B, seq) int32 tokens -> embed -> mean-pool -> (B, 512)
    e = jnp.take(emb, x_u, axis=0)         # (B, seq, 64)
    pooled = jnp.mean(e, axis=1)           # (B, 64)
    return pooled @ w_txt


# --------------------------------- main ------------------------------------ #
if __name__ == "__main__":
    key = jax.random.PRNGKey(0)
    k_xv, k_xu, k_vis, k_emb, k_tw, k_ia, k_ta = jax.random.split(key, 7)

    B, C, H, W = 8, 3, 16, 16
    SEQ, VOCAB, EMB_D = 8, 32, 64
    FEAT, ALIGN = 512, 256

    # Inputs (PyTorch conv inputs would be NCHW; kept NCHW here, only glue uses it).
    x_v = jax.random.normal(k_xv, (B, C, H, W), dtype=jnp.float32)
    x_u = jax.random.randint(k_xu, (B, SEQ), 0, VOCAB, dtype=jnp.int32)

    # Stand-in encoder parameters (deterministic).
    w_vis = jax.random.normal(k_vis, (C * H * W, FEAT), dtype=jnp.float32) * (C * H * W) ** -0.5
    emb = jax.random.normal(k_emb, (VOCAB, EMB_D), dtype=jnp.float32) * EMB_D ** -0.5
    w_txt = jax.random.normal(k_tw, (EMB_D, FEAT), dtype=jnp.float32) * EMB_D ** -0.5

    # clip_align parameters (as in __init__).
    logit_scale = jnp.array([np.log(1.0 / 0.07)], dtype=jnp.float32)  # self.temp (pre-exp)
    img_align = jax.random.normal(k_ia, (FEAT, ALIGN), dtype=jnp.float32) * FEAT ** -0.5
    txt_align = jax.random.normal(k_ta, (FEAT, ALIGN), dtype=jnp.float32) * FEAT ** -0.5
    # (temp_ikc / temp_tkc are parameters of the module but unused in forward.)

    # Glue: encoders in plain JAX.
    image_features = encode_image_stub(x_v, w_vis)
    text_features = encode_text_stub(x_u, emb, w_txt)

    # Hot path in Pallas.
    outs = clip_align_pallas(logit_scale, image_features, text_features,
                             img_align, txt_align)
    outs = jax.block_until_ready(outs)

    lpi, lpt, ai, at = outs

    # Sanity checks against a pure-JAX f32 reference. The logits path is now
    # full f32 (tight tolerance); the align path uses bf16 MXU operands with
    # f32 accumulation (looser tolerance).
    img_n = image_features / jnp.linalg.norm(image_features, axis=1, keepdims=True)
    txt_n = text_features / jnp.linalg.norm(text_features, axis=1, keepdims=True)
    ref_lpi = jnp.exp(logit_scale[0]) * img_n @ txt_n.T
    ref_ai = img_n @ img_align
    ref_ai = ref_ai / jnp.linalg.norm(ref_ai, axis=1, keepdims=True)
    ref_at = txt_n @ txt_align
    ref_at = ref_at / jnp.linalg.norm(ref_at, axis=1, keepdims=True)

    assert np.allclose(np.asarray(lpi), np.asarray(ref_lpi), rtol=1e-4, atol=1e-4)
    assert np.allclose(np.asarray(lpt), np.asarray(ref_lpi.T), rtol=1e-4, atol=1e-4)
    assert np.allclose(np.asarray(ai), np.asarray(ref_ai), rtol=2e-2, atol=2e-2)
    assert np.allclose(np.asarray(at), np.asarray(ref_at), rtol=2e-2, atol=2e-2)
    assert np.allclose(np.asarray(lpt), np.asarray(lpi).T)  # exact transpose

    print("KERNEL_OK")
</pallas_src>

<mosaic_0001>
module attributes {stable_mosaic.version = 11 : i64} {
  func.func @_clip_align_kernel(%arg0: memref<1xf32, #tpu.memory_space<smem>>, %arg1: memref<16x512xf32, #tpu.memory_space<vmem>>, %arg2: memref<512x512xbf16, #tpu.memory_space<any>>, %arg3: memref<8x8xf32, #tpu.memory_space<vmem>>, %arg4: memref<8x256xf32, #tpu.memory_space<vmem>>, %arg5: memref<8x256xf32, #tpu.memory_space<vmem>>, %arg6: memref<512x512xbf16, #tpu.memory_space<vmem>>, %arg7: memref<!tpu.dma_semaphore, #tpu.memory_space<semaphore_mem>>) attributes {dimension_semantics = [], scalar_prefetch = 0 : i64, scratch_operands = 2 : i64, tpu.core_type = #tpu.core_type<tc>} {
    tpu.enqueue_dma source(%arg2 : memref<512x512xbf16, #tpu.memory_space<any>>) target(%arg6 : memref<512x512xbf16, #tpu.memory_space<vmem>>) target_semaphore(%arg7 : memref<!tpu.dma_semaphore, #tpu.memory_space<semaphore_mem>>)
    %c0 = arith.constant 0 : index
    %c0_0 = arith.constant 0 : index
    %0 = vector.load %arg1[%c0, %c0_0] : memref<16x512xf32, #tpu.memory_space<vmem>>, vector<16x512xf32>
    %1 = arith.mulf %0, %0 : vector<16x512xf32>
    %cst = arith.constant dense<0.000000e+00> : vector<16xf32>
    %2 = vector.multi_reduction <add>, %1, %cst [1] : vector<16x512xf32> to vector<16xf32>
    %3 = vector.shape_cast %2 : vector<16xf32> to vector<16x1xf32>
    %cst_1 = arith.constant 1.000000e-30 : f32
    %4 = vector.broadcast %cst_1 : f32 to vector<16x1xf32>
    %5 = arith.maximumf %3, %4 : vector<16x1xf32>
    %6 = math.rsqrt %5 : vector<16x1xf32>
    %7 = vector.broadcast %6 : vector<16x1xf32> to vector<16x512xf32>
    %8 = arith.mulf %0, %7 : vector<16x512xf32>
    %9 = vector.extract_strided_slice %8 {offsets = [0, 0], sizes = [8, 512], strides = [1, 1]} : vector<16x512xf32> to vector<8x512xf32>
    %10 = vector.extract_strided_slice %8 {offsets = [8, 0], sizes = [8, 512], strides = [1, 1]} : vector<16x512xf32> to vector<8x512xf32>
    %cst_2 = arith.constant dense<0.000000e+00> : vector<8x8xf32>
    %11 = tpu.matmul %9, %10, %cst_2 {dimension_numbers = #tpu.dot_dimension_numbers<[1], [1], [0], [0], [0, 0, 1, 0], [], []>} : vector<8x512xf32>, vector<8x512xf32>, vector<8x8xf32> -> vector<8x8xf32>
    %c0_3 = arith.constant 0 : index
    %12 = memref.load %arg0[%c0_3] : memref<1xf32, #tpu.memory_space<smem>>
    %13 = vector.broadcast %12 : f32 to vector<8x8xf32>
    %14 = arith.mulf %13, %11 : vector<8x8xf32>
    %c0_4 = arith.constant 0 : index
    %c0_5 = arith.constant 0 : index
    %15 = vector.load %arg3[%c0_4, %c0_5] : memref<8x8xf32, #tpu.memory_space<vmem>>, vector<8x8xf32>
    tpu.vector_store %arg3[%c0_4, %c0_5], %14 {strides = array<i32>} : memref<8x8xf32, #tpu.memory_space<vmem>>, vector<8x8xf32>,
    tpu.wait_dma2 semaphore(%arg7 : memref<!tpu.dma_semaphore, #tpu.memory_space<semaphore_mem>>) src(%arg2 : memref<512x512xbf16, #tpu.memory_space<any>>) dst(%arg6 : memref<512x512xbf16, #tpu.memory_space<vmem>>)
    %16 = arith.truncf %9 : vector<8x512xf32> to vector<8x512xbf16>
    %17 = arith.truncf %10 : vector<8x512xf32> to vector<8x512xbf16>
    %c0_6 = arith.constant 0 : index
    %c0_7 = arith.constant 0 : index
    %18 = vector.load %arg6[%c0_6, %c0_7] : memref<512x512xbf16, #tpu.memory_space<vmem>>, vector<512x256xbf16>
    %c0_8 = arith.constant 0 : index
    %c256 = arith.constant 256 : index
    %19 = vector.load %arg6[%c0_8, %c256] : memref<512x512xbf16, #tpu.memory_space<vmem>>, vector<512x256xbf16>
    %cst_9 = arith.constant dense<0.000000e+00> : vector<8x256xf32>
    %20 = tpu.matmul %16, %18, %cst_9 {dimension_numbers = #tpu.dot_dimension_numbers<[1], [0], [0], [1], [0, 0, 1, 1], [], []>} : vector<8x512xbf16>, vector<512x256xbf16>, vector<8x256xf32> -> vector<8x256xf32>
    %21 = arith.mulf %20, %20 : vector<8x256xf32>
    %cst_10 = arith.constant dense<0.000000e+00> : vector<8xf32>
    %22 = vector.multi_reduction <add>, %21, %cst_10 [1] : vector<8x256xf32> to vector<8xf32>
    %23 = vector.shape_cast %22 : vector<8xf32> to vector<8x1xf32>
    %cst_11 = arith.constant 1.000000e-30 : f32
    %24 = vector.broadcast %cst_11 : f32 to vector<8x1xf32>
    %25 = arith.maximumf %23, %24 : vector<8x1xf32>
    %26 = math.rsqrt %25 : vector<8x1xf32>
    %27 = vector.broadcast %26 : vector<8x1xf32> to vector<8x256xf32>
    %28 = arith.mulf %20, %27 : vector<8x256xf32>
    %c0_12 = arith.constant 0 : index
    %c0_13 = arith.constant 0 : index
    %29 = vector.load %arg4[%c0_12, %c0_13] : memref<8x256xf32, #tpu.memory_space<vmem>>, vector<8x256xf32>
    tpu.vector_store %arg4[%c0_12, %c0_13], %28 {strides = array<i32>} : memref<8x256xf32, #tpu.memory_space<vmem>>, vector<8x256xf32>,
    %cst_14 = arith.constant dense<0.000000e+00> : vector<8x256xf32>
    %30 = tpu.matmul %17, %19, %cst_14 {dimension_numbers = #tpu.dot_dimension_numbers<[1], [0], [0], [1], [0, 0, 1, 1], [], []>} : vector<8x512xbf16>, vector<512x256xbf16>, vector<8x256xf32> -> vector<8x256xf32>
    %31 = arith.mulf %30, %30 : vector<8x256xf32>
    %cst_15 = arith.constant dense<0.000000e+00> : vector<8xf32>
    %32 = vector.multi_reduction <add>, %31, %cst_15 [1] : vector<8x256xf32> to vector<8xf32>
    %33 = vector.shape_cast %32 : vector<8xf32> to vector<8x1xf32>
    %cst_16 = arith.constant 1.000000e-30 : f32
    %34 = vector.broadcast %cst_16 : f32 to vector<8x1xf32>
    %35 = arith.maximumf %33, %34 : vector<8x1xf32>
    %36 = math.rsqrt %35 : vector<8x1xf32>
    %37 = vector.broadcast %36 : vector<8x1xf32> to vector<8x256xf32>
    %38 = arith.mulf %30, %37 : vector<8x256xf32>
    %c0_17 = arith.constant 0 : index
    %c0_18 = arith.constant 0 : index
    %39 = vector.load %arg5[%c0_17, %c0_18] : memref<8x256xf32, #tpu.memory_space<vmem>>, vector<8x256xf32>
    tpu.vector_store %arg5[%c0_17, %c0_18], %38 {strides = array<i32>} : memref<8x256xf32, #tpu.memory_space<vmem>>, vector<8x256xf32>,
    return
  }
}

</mosaic_0001>

<llo_original>
// kernel: tpu_custom_call.1
$region0: #{tpu_custom_call.1}
  #allocation0 [shape = 'u32[]', space=smem, size = 0x4, offset = 0x4, fixed_abs, tag = 'smem constant byte address 0x4 - core index']
  #allocation1 [shape = 'u32[144,128]{1,0:T(1,128)}', space=vmem, size = 0x12000, scoped, tag = 'internal scratch']
  #allocation2 [shape = 'bf16[512,512]{1,0:T(16,128)(2,1)}', space=vmem, size = 0x80000, scoped, tag = 'scratch operand']
  #allocation3 [shape = 's32[1]{0}', space=sflag, size = 0x4, scoped, tag = 'scratch operand']
  #allocation4 [shape = 'f32[1]{0:T(128)S(6)}', space=smem, size = 0x200, scoped, tag = 'scoped memory for tpu_custom_call.1']
  #allocation12 [shape = 's32[]', space=sflag, size = 0x4, offset = 0, fixed_abs, tag = 'sflag constant byte address 0x0 - dummy sync flag']
  %s0 = inlined_call_operand.<no memory space> [shape: f32[1], index: 0, kind: input, shape index: {}]
  %s1 = inlined_call_operand.hbm [shape: f32[16,512], index: 1, kind: input, shape index: {}]
  %s2 = inlined_call_operand.hbm [shape: bf16[512,512], index: 2, kind: input, shape index: {}]
  %s3 = inlined_call_operand.hbm [shape: f32[8,8], index: 3, kind: output, shape index: {0}]
  %s4 = inlined_call_operand.hbm [shape: f32[8,256], index: 4, kind: output, shape index: {1}]
  %s5 = inlined_call_operand.hbm [shape: f32[8,256], index: 5, kind: output, shape index: {2}]
  %6 = xla_tuple %s3, %s4, %s5
  %s7 = sld [smem:[#allocation0]]
  $region38: #{tpu_custom_call.1} parent=0
    _
  %s9 = ssub.s32 1, %s7
  %s10 = scalar_select 0, %s9, %s7
  %11 = sst [smem:[#allocation4]] %s0
  $region1: #{tpu_custom_call.1} parent=0
    #allocation5 [shape = 'u8[32768]{0}', space=vmem, size = 0x8000, scoped, tag = 'input window, operand 1, single buffered']
    #allocation6 [shape = 's32[1]{0}', space=sflag, size = 0x4, scoped, tag = 'scoped memory for tpu_custom_call.1']
    #allocation7 [shape = 's32[1]{0}', space=sflag, size = 0x4, scoped, tag = 'scoped memory for tpu_custom_call.1']
    #allocation8 [shape = 'u8[4096]{0}', space=vmem, size = 0x1000, scoped, tag = 'output window, operand 0, single buffered']
    #allocation9 [shape = 'u8[8192]{0}', space=vmem, size = 0x2000, scoped, tag = 'output window, operand 1, single buffered']
    #allocation10 [shape = 's32[1]{0}', space=sflag, size = 0x4, scoped, tag = 'scoped memory for tpu_custom_call.1']
    #allocation11 [shape = 'u8[8192]{0}', space=vmem, size = 0x2000, scoped, tag = 'output window, operand 2, single buffered']
    #allocation13 [shape = 'u32[9]{0}', space=smem, size = 0x24, scoped, tag = 'DMA stride descriptor']
    %12 = vsyncpa [#allocation6], 0
    %13 = vsyncpa [#allocation7], 0
    %14 = vsyncpa [#allocation10], 0
    // Predicated region
    $region2: #{tpu_custom_call.1} parent=1 // pred_check
      _
    $region3: #{tpu_custom_call.1} parent=1 // pred_check_branch
      %16 = sbr.rel (0) target = $region5
    $region4: #{tpu_custom_call.1} parent=1 // pred_region
      _
    $region5: #{tpu_custom_call.1} parent=1 // pred_fallthru
      _
    // Predicated region
    $region6: #{tpu_custom_call.1} parent=1 // pred_check
      _
    $region7: #{tpu_custom_call.1} parent=1 // pred_check_branch
      %18 = sbr.rel (0) target = $region9
    $region8: #{tpu_custom_call.1} parent=1 // pred_region
      %s20 = ssub.s32 1024, 1024
      %21 = vsyncadd [#allocation6], %s20
      %s22 = sshll.u32 [#allocation5], 4
      %s23 = int_to_ptr.vmem [resolvable:$true] %s22
      %28 = dma.hbm_to_vmem [thread:$0]  %s1, 1024, %s23, [#allocation6], 512, 512, 32
    $region9: #{tpu_custom_call.1} parent=1 // pred_fallthru
      _
    // Predicated region
    $region10: #{tpu_custom_call.1} parent=1 // pred_check
      _
    $region11: #{tpu_custom_call.1} parent=1 // pred_check_branch
      %30 = sbr.rel (0) target = $region13
    $region12: #{tpu_custom_call.1} parent=1 // pred_region
      %31 = dma.done [#allocation6], 1024
    $region13: #{tpu_custom_call.1} parent=1 // pred_fallthru
      _
    %s33 = sshll.u32 1, 14
    %s34 = sxor.u32 4294967295, %s33
    %s36 = sld [smem:[#allocation0]]
    %s37 = sadd.s32 2, %s36
    %s39 = sshll.u32 7, 26
    %s40 = sxor.u32 4294967295, %s39
    %s41 = sand.u32 0, %s40
    %s42 = sshll.u32 %s37, 26
    %s43 = sor.u32 %s41, %s42
    %s44 = sshll.u32 [#allocation2], 4
    %s45 = int_to_ptr.vmem [resolvable:$true] %s44
    %48 = sst [smem:[#allocation13]] 512
    %s49 = scalar_lea.smem [#allocation13], 1
    %50 = sst [smem:[%s49]] 512
    %s51 = scalar_lea.smem [#allocation13], 2
    %52 = sst [smem:[%s51]] 4
    %s53 = scalar_lea.smem [#allocation13], 3
    %54 = sst [smem:[%s53]] 64
    %s55 = scalar_lea.smem [#allocation13], 4
    %56 = sst [smem:[%s55]] 128
    %s57 = scalar_lea.smem [#allocation13], 5
    %58 = sst [smem:[%s57]] 2
    %s59 = scalar_lea.smem [#allocation13], 6
    %60 = sst [smem:[%s59]] 256
    %s61 = scalar_lea.smem [#allocation13], 7
    %62 = sst [smem:[%s61]] 64
    %s63 = scalar_lea.smem [#allocation13], 8
    %64 = sst [smem:[%s63]] 4
    %66 = dma.general %s2, 16384, %s45, [#allocation3], [#allocation12], [#allocation13], %s43, 0
    %v67 = vld [vmem:[#allocation5] sm:$0xff]
    %v68 = vld [vmem:[#allocation5 + $0x8] sm:$0xff]
    %v69 = vld [vmem:[#allocation5 + $0x10] sm:$0xff]
    %v70 = vld [vmem:[#allocation5 + $0x18] sm:$0xff]
    %v71 = vld [vmem:[#allocation5 + $0x20] sm:$0xff]
    %v72 = vld [vmem:[#allocation5 + $0x28] sm:$0xff]
    %v73 = vld [vmem:[#allocation5 + $0x30] sm:$0xff]
    %v74 = vld [vmem:[#allocation5 + $0x38] sm:$0xff]
    %v75 = vmul.f32 %v67, %v67
    %v76 = vmul.f32 %v68, %v68
    %v77 = vmul.f32 %v69, %v69
    %v78 = vmul.f32 %v70, %v70
    %v79 = vmul.f32 %v71, %v71
    %v80 = vmul.f32 %v72, %v72
    %v81 = vmul.f32 %v73, %v73
    %v82 = vmul.f32 %v74, %v74
    %v83 = vadd.f32 %v75, %v76
    %v84 = vadd.f32 %v83, %v77
    %v85 = vadd.f32 %v84, %v78
    %86 = vadd.xlane.f32.xlu0 %v85
    %v87 = vpop.xlane.xlu0 %86
    %v88 = vadd.f32 %v79, %v80
    %v89 = vadd.f32 %v88, %v81
    %v90 = vadd.f32 %v89, %v82
    %91 = vadd.xlane.f32.xlu0 %v90
    %v92 = vpop.xlane.xlu0 %91
    %v93 = vmax.f32 %v87, 1e-30
    %v94 = vmax.f32 %v92, 1e-30
    %v95 = vrsqrt.pop %v93
    %v96 = vrsqrt.pop %v94
    %v97 = vmul.f32 %v67, %v95
    %v98 = vmul.f32 %v68, %v95
    %v99 = vmul.f32 %v69, %v95
    %v100 = vmul.f32 %v70, %v95
    %v101 = vmul.f32 %v71, %v96
    %v102 = vmul.f32 %v72, %v96
    %v103 = vmul.f32 %v73, %v96
    %v104 = vmul.f32 %v74, %v96
    %105 = vmatprep.subr.mxu0 %v102
    %106 = vmatpush1.xpose.msra.mxu0 %v101
    %107 = vmatprep.subr.mxu0 0.0
    %108 = vmatpush1.xpose.msra.mxu0 0.0
    %109 = vmatprep.subr.mxu0 0.0
    %110 = vmatpush1.xpose.msra.mxu0 0.0
    %111 = vmatprep.subr.mxu0 0.0
    %112 = vmatpush1.xpose.msra.mxu0 0.0
    %113 = vmatprep.subr.mxu0 0.0
    %114 = vmatpush1.xpose.msra.mxu0 0.0
    %115 = vmatprep.subr.mxu0 0.0
    %116 = vmatpush1.xpose.msra.mxu0 0.0
    %117 = vmatprep.subr.mxu0 0.0
    %118 = vmatpush1.xpose.msra.mxu0 0.0
    %119 = vmatprep.subr.mxu0 0.0
    %120 = vmatpush1.xpose.msra.mxu0 0.0
    %121 = vmatprep.subr.mxu0 0.0
    %122 = vmatpush1.xpose.msra.mxu0 0.0
    %123 = vmatprep.subr.mxu0 0.0
    %124 = vmatpush1.xpose.msra.mxu0 0.0
    %125 = vmatprep.subr.mxu0 0.0
    %126 = vmatpush1.xpose.msra.mxu0 0.0
    %127 = vmatprep.subr.mxu0 0.0
    %128 = vmatpush1.xpose.msra.mxu0 0.0
    %129 = vmatprep.subr.mxu0 0.0
    %130 = vmatpush1.xpose.msra.mxu0 0.0
    %131 = vmatprep.subr.mxu0 0.0
    %132 = vmatpush1.xpose.msra.mxu0 0.0
    %133 = vmatprep.subr.mxu0 0.0
    %134 = vmatpush1.xpose.msra.mxu0 0.0
    %135 = vmatprep.subr.mxu0 0.0
    %136 = vmatpush1.xpose.msra.mxu0 0.0
    %137 = vmatprep.subr.mxu0 0.0
    %138 = vmatpush1.xpose.msra.mxu0 0.0
    %139 = vmatprep.subr.mxu0 0.0
    %140 = vmatpush1.xpose.msra.mxu0 0.0
    %141 = vmatprep.subr.mxu0 0.0
    %142 = vmatpush1.xpose.msra.mxu0 0.0
    %143 = vmatprep.subr.mxu0 0.0
    %144 = vmatpush1.xpose.msra.mxu0 0.0
    %145 = vmatprep.subr.mxu0 0.0
    %146 = vmatpush1.xpose.msra.mxu0 0.0
    %147 = vmatprep.subr.mxu0 0.0
    %148 = vmatpush1.xpose.msra.mxu0 0.0
    %149 = vmatprep.subr.mxu0 0.0
    %150 = vmatpush1.xpose.msra.mxu0 0.0
    %151 = vmatprep.subr.mxu0 0.0
    %152 = vmatpush1.xpose.msra.mxu0 0.0
    %153 = vmatprep.subr.mxu0 0.0
    %154 = vmatpush1.xpose.msra.mxu0 0.0
    %155 = vmatprep.subr.mxu0 0.0
    %156 = vmatpush1.xpose.msra.mxu0 0.0
    %157 = vmatprep.subr.mxu0 0.0
    %158 = vmatpush1.xpose.msra.mxu0 0.0
    %159 = vmatprep.subr.mxu0 0.0
    %160 = vmatpush1.xpose.msra.mxu0 0.0
    %161 = vmatprep.subr.mxu0 0.0
    %162 = vmatpush1.xpose.msra.mxu0 0.0
    %163 = vmatprep.subr.mxu0 0.0
    %164 = vmatpush1.xpose.msra.mxu0 0.0
    %165 = vmatprep.subr.mxu0 0.0
    %166 = vmatpush1.xpose.msra.mxu0 0.0
    %167 = vmatprep.subr.mxu0 0.0
    %168 = vmatpush1.xpose.msra.mxu0 0.0
    %169 = vmatprep.mubr.f32.mxu0 %v98
    %170 = vmatmul.mubr.f32.gmra.mrb[0].mxu0 %v97
    %v171 = vpop.f32.mrb[0].mxu0
    %v172 = vadd.f32 0.0, %v171
    %v173 = vpop.f32.mrb[0].mxu0
    %174 = vdwg.mxu0
    %175 = vmatprep.subr.mxu0 %v104
    %176 = vmatpush1.xpose.msra.mxu0 %v103
    %177 = vmatprep.subr.mxu0 0.0
    %178 = vmatpush1.xpose.msra.mxu0 0.0
    %179 = vmatprep.subr.mxu0 0.0
    %180 = vmatpush1.xpose.msra.mxu0 0.0
    %181 = vmatprep.subr.mxu0 0.0
    %182 = vmatpush1.xpose.msra.mxu0 0.0
    %183 = vmatprep.subr.mxu0 0.0
    %184 = vmatpush1.xpose.msra.mxu0 0.0
    %185 = vmatprep.subr.mxu0 0.0
    %186 = vmatpush1.xpose.msra.mxu0 0.0
    %187 = vmatprep.subr.mxu0 0.0
    %188 = vmatpush1.xpose.msra.mxu0 0.0
    %189 = vmatprep.subr.mxu0 0.0
    %190 = vmatpush1.xpose.msra.mxu0 0.0
    %191 = vmatprep.subr.mxu0 0.0
    %192 = vmatpush1.xpose.msra.mxu0 0.0
    %193 = vmatprep.subr.mxu0 0.0
    %194 = vmatpush1.xpose.msra.mxu0 0.0
    %195 = vmatprep.subr.mxu0 0.0
    %196 = vmatpush1.xpose.msra.mxu0 0.0
    %197 = vmatprep.subr.mxu0 0.0
    %198 = vmatpush1.xpose.msra.mxu0 0.0
    %199 = vmatprep.subr.mxu0 0.0
    %200 = vmatpush1.xpose.msra.mxu0 0.0
    %201 = vmatprep.subr.mxu0 0.0
    %202 = vmatpush1.xpose.msra.mxu0 0.0
    %203 = vmatprep.subr.mxu0 0.0
    %204 = vmatpush1.xpose.msra.mxu0 0.0
    %205 = vmatprep.subr.mxu0 0.0
    %206 = vmatpush1.xpose.msra.mxu0 0.0
    %207 = vmatprep.subr.mxu0 0.0
    %208 = vmatpush1.xpose.msra.mxu0 0.0
    %209 = vmatprep.subr.mxu0 0.0
    %210 = vmatpush1.xpose.msra.mxu0 0.0
    %211 = vmatprep.subr.mxu0 0.0
    %212 = vmatpush1.xpose.msra.mxu0 0.0
    %213 = vmatprep.subr.mxu0 0.0
    %214 = vmatpush1.xpose.msra.mxu0 0.0
    %215 = vmatprep.subr.mxu0 0.0
    %216 = vmatpush1.xpose.msra.mxu0 0.0
    %217 = vmatprep.subr.mxu0 0.0
    %218 = vmatpush1.xpose.msra.mxu0 0.0
    %219 = vmatprep.subr.mxu0 0.0
    %220 = vmatpush1.xpose.msra.mxu0 0.0
    %221 = vmatprep.subr.mxu0 0.0
    %222 = vmatpush1.xpose.msra.mxu0 0.0
    %223 = vmatprep.subr.mxu0 0.0
    %224 = vmatpush1.xpose.msra.mxu0 0.0
    %225 = vmatprep.subr.mxu0 0.0
    %226 = vmatpush1.xpose.msra.mxu0 0.0
    %227 = vmatprep.subr.mxu0 0.0
    %228 = vmatpush1.xpose.msra.mxu0 0.0
    %229 = vmatprep.subr.mxu0 0.0
    %230 = vmatpush1.xpose.msra.mxu0 0.0
    %231 = vmatprep.subr.mxu0 0.0
    %232 = vmatpush1.xpose.msra.mxu0 0.0
    %233 = vmatprep.subr.mxu0 0.0
    %234 = vmatpush1.xpose.msra.mxu0 0.0
    %235 = vmatprep.subr.mxu0 0.0
    %236 = vmatpush1.xpose.msra.mxu0 0.0
    %237 = vmatprep.subr.mxu0 0.0
    %238 = vmatpush1.xpose.msra.mxu0 0.0
    %239 = vmatprep.mubr.f32.mxu0 %v100
    %240 = vmatmul.mubr.f32.gmra.mrb[0].mxu0 %v99
    %v241 = vpop.f32.mrb[0].mxu0
    %v242 = vadd.f32 %v172, %v241
    %v243 = vpop.f32.mrb[0].mxu0
    %244 = vdwg.mxu0
    %s245 = sld [smem:[#allocation4]]
    %v246 = vstv %s245
    %v247 = vmul.f32 %v246, %v242
    %vm248 = vcmask 64512
    %249 = vst.msk [vmem:[#allocation8] sm:$0xff] %vm248, %v247
    %s250 = smul.u32 4, 64
    %s251 = smul.u32 %s250, 4
    %s252 = sshll.u32 %s251, 4
    %253 = dma.done [#allocation3], %s252
    %v254 = vpack.c.bf16 %v97, %v97
    %v255 = vpack.c.bf16 %v98, %v98
    %v256 = vpack.c.bf16 %v99, %v99
    %v257 = vpack.c.bf16 %v100, %v100
    %v258 = vpack.c.bf16 %v101, %v101
    %v259 = vpack.c.bf16 %v102, %v102
    %v260 = vpack.c.bf16 %v103, %v103
    %v261 = vpack.c.bf16 %v104, %v104
    %v262 = vld [vmem:[#allocation2] sm:$0xff]
    %v263 = vld [vmem:[#allocation2 + $0x8] sm:$0xff]
    %v264 = vld [vmem:[#allocation2 + $0x20] sm:$0xff]
    %v265 = vld [vmem:[#allocation2 + $0x28] sm:$0xff]
    %v266 = vld [vmem:[#allocation2 + $0x40] sm:$0xff]
    %v267 = vld [vmem:[#allocation2 + $0x48] sm:$0xff]
    %v268 = vld [vmem:[#allocation2 + $0x60] sm:$0xff]
    %v269 = vld [vmem:[#allocation2 + $0x68] sm:$0xff]
    %v270 = vld [vmem:[#allocation2 + $0x80] sm:$0xff]
    %v271 = vld [vmem:[#allocation2 + $0x88] sm:$0xff]
    %v272 = vld [vmem:[#allocation2 + $0xa0] sm:$0xff]
    %v273 = vld [vmem:[#allocation2 + $0xa8] sm:$0xff]
    %v274 = vld [vmem:[#allocation2 + $0xc0] sm:$0xff]
    %v275 = vld [vmem:[#allocation2 + $0xc8] sm:$0xff]
    %v276 = vld [vmem:[#allocation2 + $0xe0] sm:$0xff]
    %v277 = vld [vmem:[#allocation2 + $0xe8] sm:$0xff]
    %v278 = vld [vmem:[#allocation2 + $0x100] sm:$0xff]
    %v279 = vld [vmem:[#allocation2 + $0x108] sm:$0xff]
    %v280 = vld [vmem:[#allocation2 + $0x120] sm:$0xff]
    %v281 = vld [vmem:[#allocation2 + $0x128] sm:$0xff]
    %v282 = vld [vmem:[#allocation2 + $0x140] sm:$0xff]
    %v283 = vld [vmem:[#allocation2 + $0x148] sm:$0xff]
    %v284 = vld [vmem:[#allocation2 + $0x160] sm:$0xff]
    %v285 = vld [vmem:[#allocation2 + $0x168] sm:$0xff]
    %v286 = vld [vmem:[#allocation2 + $0x180] sm:$0xff]
    %v287 = vld [vmem:[#allocation2 + $0x188] sm:$0xff]
    %v288 = vld [vmem:[#allocation2 + $0x1a0] sm:$0xff]
    %v289 = vld [vmem:[#allocation2 + $0x1a8] sm:$0xff]
    %v290 = vld [vmem:[#allocation2 + $0x1c0] sm:$0xff]
    %v291 = vld [vmem:[#allocation2 + $0x1c8] sm:$0xff]
    %v292 = vld [vmem:[#allocation2 + $0x1e0] sm:$0xff]
    %v293 = vld [vmem:[#allocation2 + $0x1e8] sm:$0xff]
    %v294 = vld [vmem:[#allocation2 + $0x200] sm:$0xff]
    %v295 = vld [vmem:[#allocation2 + $0x208] sm:$0xff]
    %v296 = vld [vmem:[#allocation2 + $0x220] sm:$0xff]
    %v297 = vld [vmem:[#allocation2 + $0x228] sm:$0xff]
    %v298 = vld [vmem:[#allocation2 + $0x240] sm:$0xff]
    %v299 = vld [vmem:[#allocation2 + $0x248] sm:$0xff]
    %v300 = vld [vmem:[#allocation2 + $0x260] sm:$0xff]
    %v301 = vld [vmem:[#allocation2 + $0x268] sm:$0xff]
    %v302 = vld [vmem:[#allocation2 + $0x280] sm:$0xff]
    %v303 = vld [vmem:[#allocation2 + $0x288] sm:$0xff]
    %v304 = vld [vmem:[#allocation2 + $0x2a0] sm:$0xff]
    %v305 = vld [vmem:[#allocation2 + $0x2a8] sm:$0xff]
    %v306 = vld [vmem:[#allocation2 + $0x2c0] sm:$0xff]
    %v307 = vld [vmem:[#allocation2 + $0x2c8] sm:$0xff]
    %v308 = vld [vmem:[#allocation2 + $0x2e0] sm:$0xff]
    %v309 = vld [vmem:[#allocation2 + $0x2e8] sm:$0xff]
    %v310 = vld [vmem:[#allocation2 + $0x300] sm:$0xff]
    %v311 = vld [vmem:[#allocation2 + $0x308] sm:$0xff]
    %v312 = vld [vmem:[#allocation2 + $0x320] sm:$0xff]
    %v313 = vld [vmem:[#allocation2 + $0x328] sm:$0xff]
    %v314 = vld [vmem:[#allocation2 + $0x340] sm:$0xff]
    %v315 = vld [vmem:[#allocation2 + $0x348] sm:$0xff]
    %v316 = vld [vmem:[#allocation2 + $0x360] sm:$0xff]
    %v317 = vld [vmem:[#allocation2 + $0x368] sm:$0xff]
    %v318 = vld [vmem:[#allocation2 + $0x380] sm:$0xff]
    %v319 = vld [vmem:[#allocation2 + $0x388] sm:$0xff]
    %v320 = vld [vmem:[#allocation2 + $0x3a0] sm:$0xff]
    %v321 = vld [vmem:[#allocation2 + $0x3a8] sm:$0xff]
    %v322 = vld [vmem:[#allocation2 + $0x3c0] sm:$0xff]
    %v323 = vld [vmem:[#allocation2 + $0x3c8] sm:$0xff]
    %v324 = vld [vmem:[#allocation2 + $0x3e0] sm:$0xff]
    %v325 = vld [vmem:[#allocation2 + $0x3e8] sm:$0xff]
    %v326 = vld [vmem:[#allocation2 + $0x10] sm:$0xff]
    %v327 = vld [vmem:[#allocation2 + $0x18] sm:$0xff]
    %v328 = vld [vmem:[#allocation2 + $0x30] sm:$0xff]
    %v329 = vld [vmem:[#allocation2 + $0x38] sm:$0xff]
    %v330 = vld [vmem:[#allocation2 + $0x50] sm:$0xff]
    %v331 = vld [vmem:[#allocation2 + $0x58] sm:$0xff]
    %v332 = vld [vmem:[#allocation2 + $0x70] sm:$0xff]
    %v333 = vld [vmem:[#allocation2 + $0x78] sm:$0xff]
    %v334 = vld [vmem:[#allocation2 + $0x90] sm:$0xff]
    %v335 = vld [vmem:[#allocation2 + $0x98] sm:$0xff]
    %v336 = vld [vmem:[#allocation2 + $0xb0] sm:$0xff]
    %v337 = vld [vmem:[#allocation2 + $0xb8] sm:$0xff]
    %v338 = vld [vmem:[#allocation2 + $0xd0] sm:$0xff]
    %v339 = vld [vmem:[#allocation2 + $0xd8] sm:$0xff]
    %v340 = vld [vmem:[#allocation2 + $0xf0] sm:$0xff]
    %v341 = vld [vmem:[#allocation2 + $0xf8] sm:$0xff]
    %v342 = vld [vmem:[#allocation2 + $0x110] sm:$0xff]
    %v343 = vld [vmem:[#allocation2 + $0x118] sm:$0xff]
    %v344 = vld [vmem:[#allocation2 + $0x130] sm:$0xff]
    %v345 = vld [vmem:[#allocation2 + $0x138] sm:$0xff]
    %v346 = vld [vmem:[#allocation2 + $0x150] sm:$0xff]
    %v347 = vld [vmem:[#allocation2 + $0x158] sm:$0xff]
    %v348 = vld [vmem:[#allocation2 + $0x170] sm:$0xff]
    %v349 = vld [vmem:[#allocation2 + $0x178] sm:$0xff]
    %v350 = vld [vmem:[#allocation2 + $0x190] sm:$0xff]
    %v351 = vld [vmem:[#allocation2 + $0x198] sm:$0xff]
    %v352 = vld [vmem:[#allocation2 + $0x1b0] sm:$0xff]
    %v353 = vld [vmem:[#allocation2 + $0x1b8] sm:$0xff]
    %v354 = vld [vmem:[#allocation2 + $0x1d0] sm:$0xff]
    %v355 = vld [vmem:[#allocation2 + $0x1d8] sm:$0xff]
    %v356 = vld [vmem:[#allocation2 + $0x1f0] sm:$0xff]
    %v357 = vld [vmem:[#allocation2 + $0x1f8] sm:$0xff]
    %v358 = vld [vmem:[#allocation2 + $0x210] sm:$0xff]
    %v359 = vld [vmem:[#allocation2 + $0x218] sm:$0xff]
    %v360 = vld [vmem:[#allocation2 + $0x230] sm:$0xff]
    %v361 = vld [vmem:[#allocation2 + $0x238] sm:$0xff]
    %v362 = vld [vmem:[#allocation2 + $0x250] sm:$0xff]
    %v363 = vld [vmem:[#allocation2 + $0x258] sm:$0xff]
    %v364 = vld [vmem:[#allocation2 + $0x270] sm:$0xff]
    %v365 = vld [vmem:[#allocation2 + $0x278] sm:$0xff]
    %v366 = vld [vmem:[#allocation2 + $0x290] sm:$0xff]
    %v367 = vld [vmem:[#allocation2 + $0x298] sm:$0xff]
    %v368 = vld [vmem:[#allocation2 + $0x2b0] sm:$0xff]
    %v369 = vld [vmem:[#allocation2 + $0x2b8] sm:$0xff]
    %v370 = vld [vmem:[#allocation2 + $0x2d0] sm:$0xff]
    %v371 = vld [vmem:[#allocation2 + $0x2d8] sm:$0xff]
    %v372 = vld [vmem:[#allocation2 + $0x2f0] sm:$0xff]
    %v373 = vld [vmem:[#allocation2 + $0x2f8] sm:$0xff]
    %v374 = vld [vmem:[#allocation2 + $0x310] sm:$0xff]
    %v375 = vld [vmem:[#allocation2 + $0x318] sm:$0xff]
    %v376 = vld [vmem:[#allocation2 + $0x330] sm:$0xff]
    %v377 = vld [vmem:[#allocation2 + $0x338] sm:$0xff]
    %v378 = vld [vmem:[#allocation2 + $0x350] sm:$0xff]
    %v379 = vld [vmem:[#allocation2 + $0x358] sm:$0xff]
    %v380 = vld [vmem:[#allocation2 + $0x370] sm:$0xff]
    %v381 = vld [vmem:[#allocation2 + $0x378] sm:$0xff]
    %v382 = vld [vmem:[#allocation2 + $0x390] sm:$0xff]
    %v383 = vld [vmem:[#allocation2 + $0x398] sm:$0xff]
    %v384 = vld [vmem:[#allocation2 + $0x3b0] sm:$0xff]
    %v385 = vld [vmem:[#allocation2 + $0x3b8] sm:$0xff]
    %v386 = vld [vmem:[#allocation2 + $0x3d0] sm:$0xff]
    %v387 = vld [vmem:[#allocation2 + $0x3d8] sm:$0xff]
    %v388 = vld [vmem:[#allocation2 + $0x3f0] sm:$0xff]
    %v389 = vld [vmem:[#allocation2 + $0x3f8] sm:$0xff]
    %390 = vmatprep.subr.bf16.mxu0 %v263
    %391 = vmatpush1.bf16.msra.mxu0 %v262
    %392 = vmatprep.subr.bf16.mxu0 %v265
    %393 = vmatpush1.bf16.msra.mxu0 %v264
    %394 = vmatprep.subr.bf16.mxu0 %v267
    %395 = vmatpush1.bf16.msra.mxu0 %v266
    %396 = vmatprep.subr.bf16.mxu0 %v269
    %397 = vmatpush1.bf16.msra.mxu0 %v268
    %398 = vmatprep.subr.bf16.mxu0 %v271
    %399 = vmatpush1.bf16.msra.mxu0 %v270
    %400 = vmatprep.subr.bf16.mxu0 %v273
    %401 = vmatpush1.bf16.msra.mxu0 %v272
    %402 = vmatprep.subr.bf16.mxu0 %v275
    %403 = vmatpush1.bf16.msra.mxu0 %v274
    %404 = vmatprep.subr.bf16.mxu0 %v277
    %405 = vmatpush1.bf16.msra.mxu0 %v276
    %406 = vmatprep.subr.bf16.mxu0 %v279
    %407 = vmatpush1.bf16.msra.mxu0 %v278
    %408 = vmatprep.subr.bf16.mxu0 %v281
    %409 = vmatpush1.bf16.msra.mxu0 %v280
    %410 = vmatprep.subr.bf16.mxu0 %v283
    %411 = vmatpush1.bf16.msra.mxu0 %v282
    %412 = vmatprep.subr.bf16.mxu0 %v285
    %413 = vmatpush1.bf16.msra.mxu0 %v284
    %414 = vmatprep.subr.bf16.mxu0 %v287
    %415 = vmatpush1.bf16.msra.mxu0 %v286
    %416 = vmatprep.subr.bf16.mxu0 %v289
    %417 = vmatpush1.bf16.msra.mxu0 %v288
    %418 = vmatprep.subr.bf16.mxu0 %v291
    %419 = vmatpush1.bf16.msra.mxu0 %v290
    %420 = vmatprep.subr.bf16.mxu0 %v293
    %421 = vmatpush1.bf16.msra.mxu0 %v292
    %422 = vmatprep.mubr.bf16.mxu0 %v255
    %423 = vmatmul.mubr.bf16.gmra.mrb[0].mxu0 %v254
    %v424 = vpop.f32.mrb[0].mxu0
    %v425 = vadd.f32 0.0, %v424
    %v426 = vpop.f32.mrb[0].mxu0
    %v427 = vadd.f32 0.0, %v426
    %v428 = vpop.f32.mrb[0].mxu0
    %v429 = vpop.f32.mrb[0].mxu0
    %430 = vdwg.mxu0
    %431 = vmatprep.subr.bf16.mxu0 %v295
    %432 = vmatpush1.bf16.msra.mxu0 %v294
    %433 = vmatprep.subr.bf16.mxu0 %v297
    %434 = vmatpush1.bf16.msra.mxu0 %v296
    %435 = vmatprep.subr.bf16.mxu0 %v299
    %436 = vmatpush1.bf16.msra.mxu0 %v298
    %437 = vmatprep.subr.bf16.mxu0 %v301
    %438 = vmatpush1.bf16.msra.mxu0 %v300
    %439 = vmatprep.subr.bf16.mxu0 %v303
    %440 = vmatpush1.bf16.msra.mxu0 %v302
    %441 = vmatprep.subr.bf16.mxu0 %v305
    %442 = vmatpush1.bf16.msra.mxu0 %v304
    %443 = vmatprep.subr.bf16.mxu0 %v307
    %444 = vmatpush1.bf16.msra.mxu0 %v306
    %445 = vmatprep.subr.bf16.mxu0 %v309
    %446 = vmatpush1.bf16.msra.mxu0 %v308
    %447 = vmatprep.subr.bf16.mxu0 %v311
    %448 = vmatpush1.bf16.msra.mxu0 %v310
    %449 = vmatprep.subr.bf16.mxu0 %v313
    %450 = vmatpush1.bf16.msra.mxu0 %v312
    %451 = vmatprep.subr.bf16.mxu0 %v315
    %452 = vmatpush1.bf16.msra.mxu0 %v314
    %453 = vmatprep.subr.bf16.mxu0 %v317
    %454 = vmatpush1.bf16.msra.mxu0 %v316
    %455 = vmatprep.subr.bf16.mxu0 %v319
    %456 = vmatpush1.bf16.msra.mxu0 %v318
    %457 = vmatprep.subr.bf16.mxu0 %v321
    %458 = vmatpush1.bf16.msra.mxu0 %v320
    %459 = vmatprep.subr.bf16.mxu0 %v323
    %460 = vmatpush1.bf16.msra.mxu0 %v322
    %461 = vmatprep.subr.bf16.mxu0 %v325
    %462 = vmatpush1.bf16.msra.mxu0 %v324
    %463 = vmatprep.mubr.bf16.mxu0 %v257
    %464 = vmatmul.mubr.bf16.gmra.mrb[0].mxu0 %v256
    %v465 = vpop.f32.mrb[0].mxu0
    %v466 = vadd.f32 %v425, %v465
    %v467 = vpop.f32.mrb[0].mxu0
    %v468 = vadd.f32 %v427, %v467
    %v469 = vpop.f32.mrb[0].mxu0
    %v470 = vpop.f32.mrb[0].mxu0
    %471 = vdwg.mxu0
    %v472 = vmul.f32 %v466, %v466
    %v473 = vmul.f32 %v468, %v468
    %v474 = vadd.f32 %v472, %v473
    %475 = vadd.xlane.f32.xlu0 %v474
    %v476 = vpop.xlane.xlu0 %475
    %v477 = vmax.f32 %v476, 1e-30
    %v478 = vrsqrt.pop %v477
    %v479 = vmul.f32 %v466, %v478
    %v480 = vmul.f32 %v468, %v478
    %481 = vst [vmem:[#allocation9] sm:$0xff] %v479
    %482 = vst [vmem:[#allocation9 + $0x8] sm:$0xff] %v480
    %483 = vmatprep.subr.bf16.mxu0 %v327
    %484 = vmatpush1.bf16.msra.mxu0 %v326
    %485 = vmatprep.subr.bf16.mxu0 %v329
    %486 = vmatpush1.bf16.msra.mxu0 %v328
    %487 = vmatprep.subr.bf16.mxu0 %v331
    %488 = vmatpush1.bf16.msra.mxu0 %v330
    %489 = vmatprep.subr.bf16.mxu0 %v333
    %490 = vmatpush1.bf16.msra.mxu0 %v332
    %491 = vmatprep.subr.bf16.mxu0 %v335
    %492 = vmatpush1.bf16.msra.mxu0 %v334
    %493 = vmatprep.subr.bf16.mxu0 %v337
    %494 = vmatpush1.bf16.msra.mxu0 %v336
    %495 = vmatprep.subr.bf16.mxu0 %v339
    %496 = vmatpush1.bf16.msra.mxu0 %v338
    %497 = vmatprep.subr.bf16.mxu0 %v341
    %498 = vmatpush1.bf16.msra.mxu0 %v340
    %499 = vmatprep.subr.bf16.mxu0 %v343
    %500 = vmatpush1.bf16.msra.mxu0 %v342
    %501 = vmatprep.subr.bf16.mxu0 %v345
    %502 = vmatpush1.bf16.msra.mxu0 %v344
    %503 = vmatprep.subr.bf16.mxu0 %v347
    %504 = vmatpush1.bf16.msra.mxu0 %v346
    %505 = vmatprep.subr.bf16.mxu0 %v349
    %506 = vmatpush1.bf16.msra.mxu0 %v348
    %507 = vmatprep.subr.bf16.mxu0 %v351
    %508 = vmatpush1.bf16.msra.mxu0 %v350
    %509 = vmatprep.subr.bf16.mxu0 %v353
    %510 = vmatpush1.bf16.msra.mxu0 %v352
    %511 = vmatprep.subr.bf16.mxu0 %v355
    %512 = vmatpush1.bf16.msra.mxu0 %v354
    %513 = vmatprep.subr.bf16.mxu0 %v357
    %514 = vmatpush1.bf16.msra.mxu0 %v356
    %515 = vmatprep.mubr.bf16.mxu0 %v259
    %516 = vmatmul.mubr.bf16.gmra.mrb[0].mxu0 %v258
    %v517 = vpop.f32.mrb[0].mxu0
    %v518 = vadd.f32 0.0, %v517
    %v519 = vpop.f32.mrb[0].mxu0
    %v520 = vadd.f32 0.0, %v519
    %v521 = vpop.f32.mrb[0].mxu0
    %v522 = vpop.f32.mrb[0].mxu0
    %523 = vdwg.mxu0
    %524 = vmatprep.subr.bf16.mxu0 %v359
    %525 = vmatpush1.bf16.msra.mxu0 %v358
    %526 = vmatprep.subr.bf16.mxu0 %v361
    %527 = vmatpush1.bf16.msra.mxu0 %v360
    %528 = vmatprep.subr.bf16.mxu0 %v363
    %529 = vmatpush1.bf16.msra.mxu0 %v362
    %530 = vmatprep.subr.bf16.mxu0 %v365
    %531 = vmatpush1.bf16.msra.mxu0 %v364
    %532 = vmatprep.subr.bf16.mxu0 %v367
    %533 = vmatpush1.bf16.msra.mxu0 %v366
    %534 = vmatprep.subr.bf16.mxu0 %v369
    %535 = vmatpush1.bf16.msra.mxu0 %v368
    %536 = vmatprep.subr.bf16.mxu0 %v371
    %537 = vmatpush1.bf16.msra.mxu0 %v370
    %538 = vmatprep.subr.bf16.mxu0 %v373
    %539 = vmatpush1.bf16.msra.mxu0 %v372
    %540 = vmatprep.subr.bf16.mxu0 %v375
    %541 = vmatpush1.bf16.msra.mxu0 %v374
    %542 = vmatprep.subr.bf16.mxu0 %v377
    %543 = vmatpush1.bf16.msra.mxu0 %v376
    %544 = vmatprep.subr.bf16.mxu0 %v379
    %545 = vmatpush1.bf16.msra.mxu0 %v378
    %546 = vmatprep.subr.bf16.mxu0 %v381
    %547 = vmatpush1.bf16.msra.mxu0 %v380
    %548 = vmatprep.subr.bf16.mxu0 %v383
    %549 = vmatpush1.bf16.msra.mxu0 %v382
    %550 = vmatprep.subr.bf16.mxu0 %v385
    %551 = vmatpush1.bf16.msra.mxu0 %v384
    %552 = vmatprep.subr.bf16.mxu0 %v387
    %553 = vmatpush1.bf16.msra.mxu0 %v386
    %554 = vmatprep.subr.bf16.mxu0 %v389
    %555 = vmatpush1.bf16.msra.mxu0 %v388
    %556 = vmatprep.mubr.bf16.mxu0 %v261
    %557 = vmatmul.mubr.bf16.gmra.mrb[0].mxu0 %v260
    %v558 = vpop.f32.mrb[0].mxu0
    %v559 = vadd.f32 %v518, %v558
    %v560 = vpop.f32.mrb[0].mxu0
    %v561 = vadd.f32 %v520, %v560
    %v562 = vpop.f32.mrb[0].mxu0
    %v563 = vpop.f32.mrb[0].mxu0
    %564 = vdwg.mxu0
    %v565 = vmul.f32 %v559, %v559
    %v566 = vmul.f32 %v561, %v561
    %v567 = vadd.f32 %v565, %v566
    %568 = vadd.xlane.f32.xlu0 %v567
    %v569 = vpop.xlane.xlu0 %568
    %v570 = vmax.f32 %v569, 1e-30
    %v571 = vrsqrt.pop %v570
    %v572 = vmul.f32 %v559, %v571
    %v573 = vmul.f32 %v561, %v571
    %574 = vst [vmem:[#allocation11] sm:$0xff] %v572
    %575 = vst [vmem:[#allocation11 + $0x8] sm:$0xff] %v573
    // Predicated region
    $region14: #{tpu_custom_call.1} parent=1 // pred_check
      _
    $region15: #{tpu_custom_call.1} parent=1 // pred_check_branch
      %577 = sbr.rel (0) target = $region17
    $region16: #{tpu_custom_call.1} parent=1 // pred_region
      %s579 = ssub.s32 128, 128
      %580 = vsyncadd [#allocation7], %s579
      %s582 = sshll.u32 [#allocation8], 4
      %s583 = int_to_ptr.vmem [resolvable:$true] %s582
      %585 = dma.vmem_to_hbm [thread:$0]  %s583, 128, %s3, [#allocation7]
    $region17: #{tpu_custom_call.1} parent=1 // pred_fallthru
      _
    // Predicated region
    $region18: #{tpu_custom_call.1} parent=1 // pred_check
      _
    $region19: #{tpu_custom_call.1} parent=1 // pred_check_branch
      %587 = sbr.rel (0) target = $region21
    $region20: #{tpu_custom_call.1} parent=1 // pred_region
      %s589 = ssub.s32 256, 256
      %590 = vsyncadd [#allocation10], %s589
      %s592 = sshll.u32 [#allocation9], 4
      %s593 = int_to_ptr.vmem [resolvable:$true] %s592
      %595 = dma.vmem_to_hbm [thread:$0]  %s593, 256, %s4, [#allocation10]
    $region21: #{tpu_custom_call.1} parent=1 // pred_fallthru
      _
    // Predicated region
    $region22: #{tpu_custom_call.1} parent=1 // pred_check
      _
    $region23: #{tpu_custom_call.1} parent=1 // pred_check_branch
      %597 = sbr.rel (0) target = $region25
    $region24: #{tpu_custom_call.1} parent=1 // pred_region
      %s599 = ssub.s32 256, 256
      %600 = vsyncadd [#allocation10], %s599
      %s602 = sshll.u32 [#allocation11], 4
      %s603 = int_to_ptr.vmem [resolvable:$true] %s602
      %605 = dma.vmem_to_hbm [thread:$0]  %s603, 256, %s5, [#allocation10]
    $region25: #{tpu_custom_call.1} parent=1 // pred_fallthru
      _
    // Predicated region
    $region26: #{tpu_custom_call.1} parent=1 // pred_check
      _
    $region27: #{tpu_custom_call.1} parent=1 // pred_check_branch
      %607 = sbr.rel (0) target = $region29
    $region28: #{tpu_custom_call.1} parent=1 // pred_region
      %608 = dma.done [#allocation7], 128
    $region29: #{tpu_custom_call.1} parent=1 // pred_fallthru
      _
    // Predicated region
    $region30: #{tpu_custom_call.1} parent=1 // pred_check
      _
    $region31: #{tpu_custom_call.1} parent=1 // pred_check_branch
      %610 = sbr.rel (0) target = $region33
    $region32: #{tpu_custom_call.1} parent=1 // pred_region
      %611 = dma.done [#allocation10], 256
    $region33: #{tpu_custom_call.1} parent=1 // pred_fallthru
      _
    // Predicated region
    $region34: #{tpu_custom_call.1} parent=1 // pred_check
      _
    $region35: #{tpu_custom_call.1} parent=1 // pred_check_branch
      %613 = sbr.rel (0) target = $region37
    $region36: #{tpu_custom_call.1} parent=1 // pred_region
      %614 = dma.done [#allocation10], 256
    $region37: #{tpu_custom_call.1} parent=1 // pred_fallthru
      _
    %615 = vsyncpa [#allocation6], 1
    %616 = vsyncpa [#allocation7], 1
    %617 = vsyncpa [#allocation10], 1
  %618 = vsyncmov [#allocation3]
  %s619 = vpop.sfrf %618
  %p620 = scmp.eq.s32.totalorder %s619, 0
  %p621 = pneg %p620
  %623 = shalt.err (%p621)

</llo_original>
